<compile_context>
chip_gen: v5e
topology: v5e:2x2
jax: 0.10.0
libtpu: 0.0.40
codegen_flags: <defaults>
</compile_context>

<pallas_src>
import functools

import jax
import jax.numpy as jnp
from jax import lax
from jax.experimental import pallas as pl
from jax.experimental.pallas import tpu as pltpu

_LANE = 128
_SUB = 8
_BLOCK_ELEMS = _SUB * _LANE          # 1024 elements per (8,128) tile
# 4096 rows * 128 lanes * 4 B = 2 MiB per f32 input block; x2 inputs x2 pipeline
# buffers = 8 MiB, well inside the 32 MiB scoped-VMEM limit requested below.
_MAX_TILE_ROWS = 4096
_VMEM_LIMIT_BYTES = 32 * 1024 * 1024


def _num_tensorcores() -> int:
    """2 on v7x (two TCs/chip shard 'parallel' grid axes), 1 on single-TC chips."""
    try:
        kind = jax.devices()[0].device_kind.lower()
    except Exception:
        return 1
    return 2 if ("v7" in kind or "tpu7" in kind) else 1


def _focal_bce_kernel(x_ref, t_ref, out_ref, *, tile_rows, steps_per_core,
                      total_blocks, rows_in_last, has_duplicates):
    """Accumulate the sum of per-element BCE-with-logits into a resident (8,128) block."""
    c = pl.program_id(0)   # "parallel" axis (TensorCore split on v7x)
    s = pl.program_id(1)   # "arbitrary" reduction axis

    @pl.when(s == 0)
    def _():
        out_ref[...] = jnp.zeros_like(out_ref)

    def compute_bce():
        # No input pre-masking: boundary-block garbage is blocked by the select in the
        # tail branch below, and exp(-|x|) <= 1 so nothing can overflow in full blocks.
        x = x_ref[...].astype(jnp.float32)
        t = t_ref[...].astype(jnp.float32)
        # Fused, numerically stable BCE-with-logits: max(x,0) - x*t + log1p(exp(-|x|)).
        # TODO(synk): torch.binary_cross_entropy clamps each log term at -100; this fused
        # form only deviates for |x| > 100, which is immaterial for real logits.
        return jnp.maximum(x, 0.0) - x * t + jnp.log1p(jnp.exp(-jnp.abs(x)))

    def accumulate(bce):
        # Pure-VPU fold (tile_rows,128) -> (8,128) into the resident output block; the
        # single cross-lane reduction happens once, in the JAX wrapper.
        out_ref[...] += jnp.sum(bce.reshape(tile_rows // _SUB, _SUB, _LANE), axis=0)

    partial_tail = rows_in_last != tile_rows   # static Python bool

    if not partial_tail and not has_duplicates:
        # Fast path (common case): every block is full and in range -> zero mask work.
        accumulate(compute_bce())
    else:
        logical_block = c * steps_per_core + s
        last = total_blocks - 1

        @pl.when(logical_block < last)
        def _():
            accumulate(compute_bce())          # full in-range blocks: unmasked

        @pl.when(logical_block == last)
        def _():
            bce = compute_bce()
            if partial_tail:
                # Only the final block needs a (row-level) validity mask.
                row_ids = lax.broadcasted_iota(jnp.int32, (tile_rows, _LANE), 0)
                bce = jnp.where(row_ids < rows_in_last, bce, 0.0)
            accumulate(bce)
        # logical_block > last (clamped duplicate blocks) contribute nothing.


def _bce_sum_aligned(x2, t2, rows):
    """Sum of elementwise BCE-with-logits over a (rows, 128) array (rows % 8 == 0)."""
    tile_rows = min(_MAX_TILE_ROWS, rows)
    total_blocks = pl.cdiv(rows, tile_rows)
    ncores = min(_num_tensorcores(), total_blocks)
    steps_per_core = pl.cdiv(total_blocks, ncores)
    has_duplicates = ncores * steps_per_core != total_blocks
    rows_in_last = rows - (total_blocks - 1) * tile_rows

    kernel = functools.partial(
        _focal_bce_kernel,
        tile_rows=tile_rows,
        steps_per_core=steps_per_core,
        total_blocks=total_blocks,
        rows_in_last=rows_in_last,
        has_duplicates=has_duplicates,
    )

    def in_map(c, s):
        # Clamp so every DMA'd block is in bounds; duplicated / boundary blocks are
        # handled inside the kernel (scalar skip / static row mask).
        return (jnp.minimum(c * steps_per_core + s, total_blocks - 1), 0)

    n_elems = rows * _LANE
    bytes_in = n_elems * (x2.dtype.itemsize + t2.dtype.itemsize)

    partials = pl.pallas_call(
        kernel,
        out_shape=jax.ShapeDtypeStruct((ncores * _SUB, _LANE), jnp.float32),
        grid_spec=pltpu.PrefetchScalarGridSpec(
            num_scalar_prefetch=0,
            grid=(ncores, steps_per_core),
            in_specs=[
                pl.BlockSpec((tile_rows, _LANE), in_map),
                pl.BlockSpec((tile_rows, _LANE), in_map),
            ],
            out_specs=pl.BlockSpec((_SUB, _LANE), lambda c, s: (c, 0)),
        ),
        compiler_params=pltpu.CompilerParams(
            dimension_semantics=("parallel", "arbitrary"),
            vmem_limit_bytes=_VMEM_LIMIT_BYTES,
        ),
        cost_estimate=pl.CostEstimate(
            flops=8 * n_elems,
            transcendentals=2 * n_elems,
            bytes_accessed=int(bytes_in + ncores * _SUB * _LANE * 4),
        ),
    )(x2, t2)
    return jnp.sum(partials)


def focal_loss(inputs, targets, alpha=0.8, gamma=2, smooth=1):
    """Pallas implementation of FocalLoss.forward (`smooth` is unused upstream)."""
    del smooth
    n = inputs.size
    xf = inputs.reshape(-1)   # keep native dtype (bf16 inputs halve HBM traffic);
    tf = targets.reshape(-1)  # the kernel casts to f32 internally.

    n_aligned = (n // _BLOCK_ELEMS) * _BLOCK_ELEMS
    total = jnp.float32(0.0)

    if n_aligned:
        rows = n_aligned // _LANE                # multiple of 8 by construction
        x2 = xf[:n_aligned].reshape(rows, _LANE)  # full-extent slice is a no-op when aligned
        t2 = tf[:n_aligned].reshape(rows, _LANE)
        total = total + _bce_sum_aligned(x2, t2, rows)

    if n != n_aligned:
        # <1024-element ragged tail: tiny plain-JAX epilogue instead of a jnp.pad copy
        # of both full tensors through HBM.
        xt = xf[n_aligned:].astype(jnp.float32)
        tt = tf[n_aligned:].astype(jnp.float32)
        total = total + jnp.sum(
            jnp.maximum(xt, 0.0) - xt * tt + jnp.log1p(jnp.exp(-jnp.abs(xt))))

    # O(1) epilogue: mean + focal transform fuse trivially in XLA.
    bce_mean = total / jnp.float32(n)
    bce_exp = jnp.exp(-bce_mean)
    return alpha * (1.0 - bce_exp) ** gamma * bce_mean


def _focal_loss_ref(inputs, targets, alpha=0.8, gamma=2):
    """Torch-faithful reference: sigmoid -> binary_cross_entropy(mean) -> focal."""
    p = jax.nn.sigmoid(inputs.reshape(-1).astype(jnp.float32))
    t = targets.reshape(-1).astype(jnp.float32)
    log_p = jnp.maximum(jnp.log(p), -100.0)
    log_1mp = jnp.maximum(jnp.log(1.0 - p), -100.0)
    bce = jnp.mean(-(t * log_p + (1.0 - t) * log_1mp))
    return alpha * (1.0 - jnp.exp(-bce)) ** gamma * bce


if __name__ == "__main__":
    key = jax.random.PRNGKey(0)
    k1, k2 = jax.random.split(key)
    # NCHW logits and binary targets, small shapes consistent with a seg-loss use case.
    x = jax.random.normal(k1, (2, 4, 16, 16), dtype=jnp.float32)
    tgt = (jax.random.uniform(k2, (2, 4, 16, 16)) > 0.5).astype(jnp.float32)

    loss = focal_loss(x, tgt)
    jax.block_until_ready(loss)

    ref = _focal_loss_ref(x, tgt)
    if not jnp.allclose(loss, ref, atol=1e-5, rtol=1e-5):
        raise AssertionError(f"mismatch: pallas={loss} ref={ref}")
    print("KERNEL_OK")
</pallas_src>

<mosaic_0001>
module attributes {stable_mosaic.version = 11 : i64} {
  func.func @_focal_bce_kernel(%arg0: i32, %arg1: i32, %arg2: memref<16x128xf32, #tpu.memory_space<vmem>>, %arg3: memref<16x128xf32, #tpu.memory_space<vmem>>, %arg4: memref<8x128xf32, #tpu.memory_space<vmem>>) attributes {dimension_semantics = [#tpu.dimension_semantics<parallel>, #tpu.dimension_semantics<arbitrary>], iteration_bounds = array<i64: 1, 1>, scalar_prefetch = 0 : i64, scratch_operands = 0 : i64, tpu.core_type = #tpu.core_type<tc>, window_params = [{transform_indices = @transform_0, window_bounds = array<i64: 16, 128>}, {transform_indices = @transform_1, window_bounds = array<i64: 16, 128>}, {transform_indices = @transform_2, window_bounds = array<i64: 8, 128>}]} {
    %c0_i32 = arith.constant 0 : i32
    %0 = arith.cmpi eq, %arg1, %c0_i32 : i32
    %1 = arith.extui %0 : i1 to i32
    %c0_i32_0 = arith.constant 0 : i32
    %2 = arith.cmpi ne, %1, %c0_i32_0 : i32
    scf.if %2 {
      %cst_10 = arith.constant 0.000000e+00 : f32
      %20 = vector.broadcast %cst_10 : f32 to vector<8x128xf32>
      %c0_11 = arith.constant 0 : index
      %c0_12 = arith.constant 0 : index
      %21 = vector.load %arg4[%c0_11, %c0_12] : memref<8x128xf32, #tpu.memory_space<vmem>>, vector<8x128xf32>
      tpu.vector_store %arg4[%c0_11, %c0_12], %20 {strides = array<i32>} : memref<8x128xf32, #tpu.memory_space<vmem>>, vector<8x128xf32>,
    } else {
    }
    %c0 = arith.constant 0 : index
    %c0_1 = arith.constant 0 : index
    %3 = vector.load %arg2[%c0, %c0_1] : memref<16x128xf32, #tpu.memory_space<vmem>>, vector<16x128xf32>
    %c0_2 = arith.constant 0 : index
    %c0_3 = arith.constant 0 : index
    %4 = vector.load %arg3[%c0_2, %c0_3] : memref<16x128xf32, #tpu.memory_space<vmem>>, vector<16x128xf32>
    %cst = arith.constant 0.000000e+00 : f32
    %5 = vector.broadcast %cst : f32 to vector<16x128xf32>
    %6 = arith.maximumf %3, %5 : vector<16x128xf32>
    %7 = arith.mulf %3, %4 : vector<16x128xf32>
    %8 = arith.subf %6, %7 : vector<16x128xf32>
    %9 = math.absf %3 : vector<16x128xf32>
    %cst_4 = arith.constant 0.000000e+00 : f32
    %10 = vector.broadcast %cst_4 : f32 to vector<16x128xf32>
    %11 = arith.subf %10, %9 : vector<16x128xf32>
    %12 = math.exp %11 : vector<16x128xf32>
    %13 = math.log1p %12 : vector<16x128xf32>
    %14 = arith.addf %8, %13 : vector<16x128xf32>
    %c0_5 = arith.constant 0 : index
    %c0_6 = arith.constant 0 : index
    %15 = vector.load %arg4[%c0_5, %c0_6] : memref<8x128xf32, #tpu.memory_space<vmem>>, vector<8x128xf32>
    %16 = vector.shape_cast %14 : vector<16x128xf32> to vector<2x8x128xf32>
    %cst_7 = arith.constant dense<0.000000e+00> : vector<8x128xf32>
    %17 = vector.multi_reduction <add>, %16, %cst_7 [0] : vector<2x8x128xf32> to vector<8x128xf32>
    %18 = arith.addf %15, %17 : vector<8x128xf32>
    %c0_8 = arith.constant 0 : index
    %c0_9 = arith.constant 0 : index
    %19 = vector.load %arg4[%c0_8, %c0_9] : memref<8x128xf32, #tpu.memory_space<vmem>>, vector<8x128xf32>
    tpu.vector_store %arg4[%c0_8, %c0_9], %18 {strides = array<i32>} : memref<8x128xf32, #tpu.memory_space<vmem>>, vector<8x128xf32>,
    return
  }
  func.func @transform_0(%arg0: i32, %arg1: i32) -> (i32, i32) {
    %c1_i32 = arith.constant 1 : i32
    %0 = arith.muli %arg0, %c1_i32 : i32
    %1 = arith.addi %0, %arg1 : i32
    %c0_i32 = arith.constant 0 : i32
    %2 = arith.minsi %1, %c0_i32 : i32
    %c0_i32_0 = arith.constant 0 : i32
    %c0_i32_1 = arith.constant 0 : i32
    return %2, %c0_i32_0 : i32, i32
  }
  func.func @transform_1(%arg0: i32, %arg1: i32) -> (i32, i32) {
    %c1_i32 = arith.constant 1 : i32
    %0 = arith.muli %arg0, %c1_i32 : i32
    %1 = arith.addi %0, %arg1 : i32
    %c0_i32 = arith.constant 0 : i32
    %2 = arith.minsi %1, %c0_i32 : i32
    %c0_i32_0 = arith.constant 0 : i32
    %c0_i32_1 = arith.constant 0 : i32
    return %2, %c0_i32_0 : i32, i32
  }
  func.func @transform_2(%arg0: i32, %arg1: i32) -> (i32, i32) {
    %c0_i32 = arith.constant 0 : i32
    %c0_i32_0 = arith.constant 0 : i32
    return %arg0, %c0_i32 : i32, i32
  }
}

</mosaic_0001>

<llo_original>
// kernel: tpu_custom_call.1
$region0: #{tpu_custom_call.1}
  #allocation0 [shape = 'u32[]', space=smem, size = 0x4, offset = 0x4, fixed_abs, tag = 'smem constant byte address 0x4 - core index']
  #allocation1 [shape = 'u32[72,128]{1,0:T(1,128)}', space=vmem, size = 0x9000, scoped, tag = 'internal scratch']
  %s0 = inlined_call_operand.hbm [shape: f32[16,128], index: 0, kind: input, shape index: {}]
  %s1 = inlined_call_operand.hbm [shape: f32[16,128], index: 1, kind: input, shape index: {}]
  %s2 = inlined_call_operand.hbm [shape: f32[8,128], index: 2, kind: output, shape index: {}]
  %s3 = sld [smem:[#allocation0]]
  $region30: #{tpu_custom_call.1} parent=0
    _
  %s5 = ssub.s32 1, %s3
  %s6 = scalar_select 0, %s5, %s3
  $region1: #{tpu_custom_call.1} parent=0
    #allocation2 [shape = 'u8[8192]{0}', space=vmem, size = 0x2000, scoped, tag = 'input window, operand 0, single buffered']
    #allocation3 [shape = 's32[1]{0}', space=sflag, size = 0x4, scoped, tag = 'scoped memory for tpu_custom_call.1']
    #allocation4 [shape = 's32[1]{0}', space=sflag, size = 0x4, scoped, tag = 'scoped memory for tpu_custom_call.1']
    #allocation5 [shape = 'u8[8192]{0}', space=vmem, size = 0x2000, scoped, tag = 'input window, operand 1, single buffered']
    #allocation6 [shape = 's32[1]{0}', space=sflag, size = 0x4, scoped, tag = 'scoped memory for tpu_custom_call.1']
    #allocation7 [shape = 'u8[4096]{0}', space=vmem, size = 0x1000, scoped, tag = 'output window, operand 0, single buffered']
    %7 = vsyncpa [#allocation3], 0
    %8 = vsyncpa [#allocation6], 0
    %9 = vsyncpa [#allocation4], 0
    // Predicated region
    $region2: #{tpu_custom_call.1} parent=1 // pred_check
      _
    $region3: #{tpu_custom_call.1} parent=1 // pred_check_branch
      %11 = sbr.rel (0) target = $region5
    $region4: #{tpu_custom_call.1} parent=1 // pred_region
      %s12 = sadd.s32 0, 0
      %p13 = scmp.lt.s32.totalorder %s12, 0
      %s14 = scalar_select %p13, %s12, 0
      %s15 = smul.u32 2, %s14
      %17 = vsyncadd [#allocation3], 0
      %s18 = smul.addr %s15, 8
      %s19 = scalar_lea.hbm %s0, %s18
      %s20 = sshll.u32 %s19, 4
      %s21 = int_to_ptr.hbm [resolvable:$true] %s20
      %s22 = sshll.u32 [#allocation2], 4
      %s23 = int_to_ptr.vmem [resolvable:$true] %s22
      %28 = dma.hbm_to_vmem [thread:$0]  %s21, 256, %s23, [#allocation3], 128, 128, 8
    $region5: #{tpu_custom_call.1} parent=1 // pred_fallthru
      _
    // Predicated region
    $region6: #{tpu_custom_call.1} parent=1 // pred_check
      _
    $region7: #{tpu_custom_call.1} parent=1 // pred_check_branch
      %30 = sbr.rel (0) target = $region9
    $region8: #{tpu_custom_call.1} parent=1 // pred_region
      %s31 = sadd.s32 0, 0
      %p32 = scmp.lt.s32.totalorder %s31, 0
      %s33 = scalar_select %p32, %s31, 0
      %s34 = smul.u32 2, %s33
      %36 = vsyncadd [#allocation6], 0
      %s37 = smul.addr %s34, 8
      %s38 = scalar_lea.hbm %s1, %s37
      %s39 = sshll.u32 %s38, 4
      %s40 = int_to_ptr.hbm [resolvable:$true] %s39
      %s41 = sshll.u32 [#allocation5], 4
      %s42 = int_to_ptr.vmem [resolvable:$true] %s41
      %47 = dma.hbm_to_vmem [thread:$0]  %s40, 256, %s42, [#allocation6], 128, 128, 8
    $region9: #{tpu_custom_call.1} parent=1 // pred_fallthru
      _
    // Predicated region
    $region10: #{tpu_custom_call.1} parent=1 // pred_check
      _
    $region11: #{tpu_custom_call.1} parent=1 // pred_check_branch
      %49 = sbr.rel (0) target = $region13
    $region12: #{tpu_custom_call.1} parent=1 // pred_region
      %51 = dma.done [#allocation3], 256
    $region13: #{tpu_custom_call.1} parent=1 // pred_fallthru
      _
    // Predicated region
    $region14: #{tpu_custom_call.1} parent=1 // pred_check
      _
    $region15: #{tpu_custom_call.1} parent=1 // pred_check_branch
      %53 = sbr.rel (0) target = $region17
    $region16: #{tpu_custom_call.1} parent=1 // pred_region
      %55 = dma.done [#allocation6], 256
    $region17: #{tpu_custom_call.1} parent=1 // pred_fallthru
      _
    %s56 = sadd.s32 0, 0
    %p57 = scmp.lt.s32.totalorder %s56, 0
    %s58 = scalar_select %p57, %s56, 0
    %s59 = smul.u32 2, %s58
    %s60 = sadd.s32 0, 0
    %p61 = scmp.lt.s32.totalorder %s60, 0
    %s62 = scalar_select %p61, %s60, 0
    %s63 = smul.u32 2, %s62
    %p64 = scmp.eq.s32.totalorder 0, 0
    // Predicated region
    $region18: #{tpu_custom_call.1} parent=1 // pred_check
      %p65 = pneg %p64
    $region19: #{tpu_custom_call.1} parent=1 // pred_check_branch
      %67 = sbr.rel (%p65) target = $region21
    $region20: #{tpu_custom_call.1} parent=1 // pred_region
      %68 = vst [vmem:[#allocation7] sm:$0xff] 0.0
    $region21: #{tpu_custom_call.1} parent=1 // pred_fallthru
      _
    %v69 = vld [vmem:[#allocation2] sm:$0xff]
    %v70 = vld [vmem:[#allocation2 + $0x8] sm:$0xff]
    %v71 = vld [vmem:[#allocation5] sm:$0xff]
    %v72 = vld [vmem:[#allocation5 + $0x8] sm:$0xff]
    %v73 = vmax.f32 %v69, 0.0
    %v74 = vmax.f32 %v70, 0.0
    %v75 = vmul.f32 %v69, %v71
    %v76 = vmul.f32 %v70, %v72
    %v77 = vsub.f32 %v73, %v75
    %v78 = vsub.f32 %v74, %v76
    %v79 = vand.u32 2147483647, %v69
    %v80 = vand.u32 2147483647, %v70
    %v81 = vsub.f32 0.0, %v79
    %v82 = vsub.f32 0.0, %v80
    %v83 = vmul.f32 %v81, 1.442695
    %v84 = vpow.pop %v83
    %v85 = vmul.f32 %v82, 1.442695
    %v86 = vpow.pop %v85
    %v87 = vadd.f32 %v84, 1.0
    %v88 = vlog2.pop %v87
    %v89 = vmul.f32 %v88, 0.6931472
    %v90 = vmul.f32 -0.5, %v84
    %v91 = vadd.f32 %v90, 1.0
    %v92 = vmul.f32 %v91, %v84
    %v93 = vand.u32 2147483647, %v84
    %vm94 = vcmp.lt.f32.partialorder %v93, 0.0004427343
    %v95 = vsel %vm94, %v92, %v89
    %v96 = vadd.f32 %v86, 1.0
    %v97 = vlog2.pop %v96
    %v98 = vmul.f32 %v97, 0.6931472
    %v99 = vmul.f32 -0.5, %v86
    %v100 = vadd.f32 %v99, 1.0
    %v101 = vmul.f32 %v100, %v86
    %v102 = vand.u32 2147483647, %v86
    %vm103 = vcmp.lt.f32.partialorder %v102, 0.0004427343
    %v104 = vsel %vm103, %v101, %v98
    %v105 = vadd.f32 %v77, %v95
    %v106 = vadd.f32 %v78, %v104
    %v107 = vld [vmem:[#allocation7] sm:$0xff]
    %v108 = vadd.f32 %v105, %v106
    %v109 = vadd.f32 %v107, %v108
    %110 = vst [vmem:[#allocation7] sm:$0xff] %v109
    // Predicated region
    $region22: #{tpu_custom_call.1} parent=1 // pred_check
      _
    $region23: #{tpu_custom_call.1} parent=1 // pred_check_branch
      %112 = sbr.rel (0) target = $region25
    $region24: #{tpu_custom_call.1} parent=1 // pred_region
      %114 = vsyncadd [#allocation4], 0
      %s116 = sshll.u32 [#allocation7], 4
      %s117 = int_to_ptr.vmem [resolvable:$true] %s116
      %s118 = sshll.u32 %s2, 4
      %s119 = int_to_ptr.hbm [resolvable:$true] %s118
      %121 = dma.vmem_to_hbm [thread:$0]  %s117, 128, %s119, [#allocation4]
    $region25: #{tpu_custom_call.1} parent=1 // pred_fallthru
      _
    // Predicated region
    $region26: #{tpu_custom_call.1} parent=1 // pred_check
      _
    $region27: #{tpu_custom_call.1} parent=1 // pred_check_branch
      %123 = sbr.rel (0) target = $region29
    $region28: #{tpu_custom_call.1} parent=1 // pred_region
      %125 = dma.done [#allocation4], 128
    $region29: #{tpu_custom_call.1} parent=1 // pred_fallthru
      _
    %126 = vsyncpa [#allocation3], 1
    %127 = vsyncpa [#allocation6], 1
    %128 = vsyncpa [#allocation4], 1

</llo_original>
